<compile_context>
chip_gen: v7x
topology: tpu7x:2x2x1
jax: 0.10.0
libtpu: 0.0.40
codegen_flags: <defaults>
</compile_context>

<pallas_src>
import functools
import math

import jax
import jax.numpy as jnp
from jax import lax
from jax.experimental import pallas as pl
from jax.experimental.pallas import tpu as pltpu


def _self_attn_kernel(x_ref, w_ref, gamma_ref, o_ref):
    """Fused SimpleSelfAttention for a block of batch elements.

    x_ref     : (Bt, C, Lp) VMEM   flattened activations, Lp on the lane axis
    w_ref     : (C, C)      VMEM   effective (spectral-normalized) conv weight
    gamma_ref : (1, 1)      SMEM   residual-mix scalar
    o_ref     : (Bt, C, Lp) VMEM   output
    """
    bt, c, _ = x_ref.shape
    x = x_ref[...]                      # native dtype; single load, reused twice
    gamma = gamma_ref[0, 0]

    # G[b] = x[b] @ x[b]^T: contract both operands over the lane (L) axis,
    # batched over dim 0, f32 accumulation on the MXU.  (Bt, C, C)
    g = lax.dot_general(x, x, (((2,), (2,)), ((0,), (0,))),
                        preferred_element_type=jnp.float32)

    # M[b] = G[b] @ W: tiny (C, C) matmul in f32 (broadcast W across the batch
    # block; C^3 FLOPs, negligible).  (Bt, C, C)
    w = jnp.broadcast_to(w_ref[...].astype(jnp.float32), (bt, c, c))
    m = lax.dot_general(g, w, (((2,), (1,)), ((0,), (0,))),
                        preferred_element_type=jnp.float32)

    # o[b] = M[b] @ x[b]: the single large (C, L) matmul. x stays in its native
    # dtype (bf16 MXU path for bf16 models); the tiny M is cast down to match.
    o = lax.dot_general(m.astype(x.dtype), x, (((2,), (1,)), ((0,), (0,))),
                        preferred_element_type=jnp.float32)          # (Bt, C, Lp)

    # Residual in the output dtype -> no extra f32 copy of x kept live.
    o_ref[...] = (gamma * o).astype(o_ref.dtype) + x


def _spectral_normalize(w_oik, u0, n_power_iterations=1, eps=1e-12):
    """nn.utils.spectral_norm on a Conv1d weight (out, in, ks): power-iterate
    on the (out, in*ks) matrix and divide by sigma.  Pure-JAX O(C^2) weight
    preprocessing; runs outside the kernel."""
    out_ch = w_oik.shape[0]
    w_mat = w_oik.reshape(out_ch, -1)
    l2n = lambda v: v / (jnp.linalg.norm(v) + eps)
    u = l2n(u0)
    v = u
    for _ in range(n_power_iterations):
        v = l2n(w_mat.T @ u)
        u = l2n(w_mat @ v)
    sigma = u @ (w_mat @ v)
    return w_oik / sigma


@functools.lru_cache(maxsize=None)
def _vmem_capacity_bytes() -> int:
    """Per-core VMEM capacity (64 MiB on v7x, 128 MiB on v5e/v6e)."""
    try:
        cap = getattr(pltpu.get_tpu_info(), "vmem_capacity_bytes", None)
        if cap:
            return int(cap)
    except Exception:
        pass
    return 64 << 20        # conservative fallback: v7x per-TensorCore VMEM


def _choose_batch_tile(n, bytes_per_batch, target_bytes=4 << 20):
    """Largest divisor Bt of n with block <= target, keeping >= 2 grid steps
    when n >= 2 so both v7x TensorCores receive work."""
    min_steps = 2 if n >= 2 else 1
    best = 1
    for bt in range(1, n + 1):
        if n % bt:
            continue
        if n // bt < min_steps:
            continue
        if bt * bytes_per_batch <= target_bytes:
            best = bt
    return best


@functools.partial(jax.jit, static_argnames=("sym",))
def self_attention_conv_forward(x, w_oik, gamma, u0, sym=False):
    """x: (N, C, *spatial) exactly like the PyTorch module (NCHW for 2-D)."""
    size = x.shape
    N, C = size[0], size[1]
    L = math.prod(size[2:])
    Lp = ((L + 127) // 128) * 128                  # lane-dense last dim

    xf = x.reshape(N, C, L)                        # free reshape, no transpose
    if Lp != L:
        # Zero-padding extra columns is exact: they contribute nothing to the
        # Gram and produce zero outputs, sliced off below.
        xf = jnp.pad(xf, ((0, 0), (0, 0), (0, Lp - L)))

    # TODO(synk): only ks=1 (the module default) is implemented; ks>1 would
    # additionally need a small depth-K conv along L inside the kernel.
    w_eff = _spectral_normalize(w_oik, u0).reshape(C, C)
    if sym:
        w_eff = 0.5 * (w_eff + w_eff.T)
    gamma_arr = jnp.reshape(gamma, (1, 1)).astype(jnp.float32)

    itemsize = jnp.dtype(x.dtype).itemsize
    per_batch_bytes = C * Lp * itemsize
    bt = _choose_batch_tile(N, per_batch_bytes)
    blk_bytes = bt * per_batch_bytes

    # VMEM budget: double-buffered in + out blocks, f32 intermediates
    # (o + G + M), weight, plus headroom; capped at 3/4 of this chip's VMEM.
    f32_tmp = bt * C * Lp * 4 + 2 * bt * C * C * 4
    need = 4 * blk_bytes + f32_tmp + 2 * C * C * 4 + (8 << 20)
    cap = (_vmem_capacity_bytes() * 3) // 4
    vmem_limit = int(max(min(need, cap), 16 << 20))
    # TODO(synk): when a single (1, C, Lp) block no longer fits (huge C*L),
    # add an "arbitrary" L-tile grid axis that accumulates G in VMEM scratch
    # and streams the M @ x pass per L tile (also balances v7x cores at N==1).

    out = pl.pallas_call(
        _self_attn_kernel,
        out_shape=jax.ShapeDtypeStruct((N, C, Lp), x.dtype),
        grid=(N // bt,),
        in_specs=[
            pl.BlockSpec((bt, C, Lp), lambda n: (n, 0, 0)),
            pl.BlockSpec((C, C), lambda n: (0, 0)),
            pl.BlockSpec((1, 1), lambda n: (0, 0),
                         memory_space=pltpu.MemorySpace.SMEM),
        ],
        out_specs=pl.BlockSpec((bt, C, Lp), lambda n: (n, 0, 0)),
        compiler_params=pltpu.CompilerParams(
            dimension_semantics=("parallel",),
            vmem_limit_bytes=vmem_limit,
        ),
    )(xf, w_eff, gamma_arr)

    if Lp != L:
        out = out[..., :L]
    return out.reshape(size)


def _ref_forward(x, w_oik, gamma, u0, sym=False):
    """Pure-JAX reference mirroring the PyTorch forward (original association)."""
    size = x.shape
    N, C = size[0], size[1]
    xf = x.reshape(N, C, -1)
    w = _spectral_normalize(w_oik, u0).reshape(C, C)
    if sym:
        w = 0.5 * (w + w.T)
    convx = jnp.einsum("oi,nil->nol", w, xf)
    xxT = jnp.einsum("nil,njl->nij", xf, xf)
    o = jnp.einsum("nij,njl->nil", xxT, convx)
    o = gamma.reshape(()) * o + xf
    return o.reshape(size)


if __name__ == "__main__":
    key = jax.random.PRNGKey(0)
    k_x, k_w, k_u = jax.random.split(key, 3)

    N, C, H, W = 4, 4, 16, 16                      # x like the PyTorch module: (N, C, H, W)
    x = jax.random.normal(k_x, (N, C, H, W), jnp.float32)

    # Conv1d(n_in, n_in, ks=1, bias=False) weight, kaiming_normal_-style init (OIK).
    w_oik = jax.random.normal(k_w, (C, C, 1), jnp.float32) * math.sqrt(2.0 / C)
    # spectral_norm's persistent `u` buffer (random-normal at wrap time in PyTorch).
    u0 = jax.random.normal(k_u, (C,), jnp.float32)
    # gamma is initialized to 0.0 in the module; use a nonzero "trained" value so
    # the attention path is actually exercised (forward semantics unchanged).
    gamma = jnp.array([0.5], jnp.float32)

    out = jax.block_until_ready(self_attention_conv_forward(x, w_oik, gamma, u0))
    assert out.shape == (N, C, H, W), out.shape

    ref = jax.block_until_ready(_ref_forward(x, w_oik, gamma, u0))
    # The kernel reassociates the matmul chain (G @ W @ x vs G @ (W x)); with
    # the MXU's default (bf16-pass) f32 precision that changes rounding order,
    # so compare with a scale-aware max-norm tolerance instead of tight
    # elementwise rtol.
    max_err = float(jnp.max(jnp.abs(out - ref)))
    scale = float(jnp.max(jnp.abs(ref)))
    if max_err > 2e-2 * max(scale, 1.0):
        raise AssertionError(
            f"Pallas self_attention_conv mismatch vs JAX reference "
            f"(max |err|={max_err}, ref scale={scale})")

    print("KERNEL_OK")
</pallas_src>

<mosaic_0001>
module attributes {stable_mosaic.version = 11 : i64} {
  func.func @_self_attn_kernel(%arg0: i32, %arg1: memref<2x4x256xf32, #tpu.memory_space<vmem>>, %arg2: memref<4x4xf32, #tpu.memory_space<vmem>>, %arg3: memref<1x1xf32, #tpu.memory_space<smem>>, %arg4: memref<2x4x256xf32, #tpu.memory_space<vmem>>) attributes {dimension_semantics = [#tpu.dimension_semantics<parallel>], iteration_bounds = array<i64: 2>, scalar_prefetch = 0 : i64, scratch_operands = 0 : i64, tpu.core_type = #tpu.core_type<tc>, window_params = [{transform_indices = @transform_0, window_bounds = array<i64: 2, 4, 256>}, {pipeline_mode = #tpu.pipeline_mode<synchronous>, transform_indices = @transform_1, window_bounds = array<i64: 4, 4>}, {transform_indices = @transform_2, window_bounds = array<i64: 1, 1>}, {transform_indices = @transform_3, window_bounds = array<i64: 2, 4, 256>}]} {
    %c0 = arith.constant 0 : index
    %c0_0 = arith.constant 0 : index
    %c0_1 = arith.constant 0 : index
    %0 = vector.load %arg1[%c0, %c0_0, %c0_1] : memref<2x4x256xf32, #tpu.memory_space<vmem>>, vector<2x4x256xf32>
    %c0_2 = arith.constant 0 : index
    %c0_3 = arith.constant 0 : index
    %1 = memref.load %arg3[%c0_2, %c0_3] : memref<1x1xf32, #tpu.memory_space<smem>>
    %cst = arith.constant dense<0.000000e+00> : vector<2x4x4xf32>
    %2 = tpu.matmul %0, %0, %cst {dimension_numbers = #tpu.dot_dimension_numbers<[2], [2], [1], [1], [0, 0, 0, 1, 1, 1], [0], [0]>} : vector<2x4x256xf32>, vector<2x4x256xf32>, vector<2x4x4xf32> -> vector<2x4x4xf32>
    %c0_4 = arith.constant 0 : index
    %c0_5 = arith.constant 0 : index
    %3 = vector.load %arg2[%c0_4, %c0_5] : memref<4x4xf32, #tpu.memory_space<vmem>>, vector<4x4xf32>
    %4 = vector.shape_cast %3 : vector<4x4xf32> to vector<1x4x4xf32>
    %5 = vector.broadcast %4 : vector<1x4x4xf32> to vector<2x4x4xf32>
    %cst_6 = arith.constant dense<0.000000e+00> : vector<2x4x4xf32>
    %6 = tpu.matmul %2, %5, %cst_6 {dimension_numbers = #tpu.dot_dimension_numbers<[2], [1], [1], [2], [0, 0, 0, 1, 1, 2], [0], [0]>} : vector<2x4x4xf32>, vector<2x4x4xf32>, vector<2x4x4xf32> -> vector<2x4x4xf32>
    %cst_7 = arith.constant dense<0.000000e+00> : vector<2x4x256xf32>
    %7 = tpu.matmul %6, %0, %cst_7 {dimension_numbers = #tpu.dot_dimension_numbers<[2], [1], [1], [2], [0, 0, 0, 1, 1, 2], [0], [0]>} : vector<2x4x4xf32>, vector<2x4x256xf32>, vector<2x4x256xf32> -> vector<2x4x256xf32>
    %8 = vector.broadcast %1 : f32 to vector<2x4x256xf32>
    %9 = arith.mulf %8, %7 : vector<2x4x256xf32>
    %10 = arith.addf %9, %0 : vector<2x4x256xf32>
    %c0_8 = arith.constant 0 : index
    %c0_9 = arith.constant 0 : index
    %c0_10 = arith.constant 0 : index
    %11 = vector.load %arg4[%c0_8, %c0_9, %c0_10] : memref<2x4x256xf32, #tpu.memory_space<vmem>>, vector<2x4x256xf32>
    tpu.vector_store %arg4[%c0_8, %c0_9, %c0_10], %10 {strides = array<i32>} : memref<2x4x256xf32, #tpu.memory_space<vmem>>, vector<2x4x256xf32>,
    return
  }
  func.func @transform_0(%arg0: i32) -> (i32, i32, i32) {
    %c0_i32 = arith.constant 0 : i32
    %c0_i32_0 = arith.constant 0 : i32
    %c0_i32_1 = arith.constant 0 : i32
    return %arg0, %c0_i32, %c0_i32_0 : i32, i32, i32
  }
  func.func @transform_1(%arg0: i32) -> (i32, i32) {
    %c0_i32 = arith.constant 0 : i32
    %c0_i32_0 = arith.constant 0 : i32
    %c0_i32_1 = arith.constant 0 : i32
    return %c0_i32, %c0_i32_0 : i32, i32
  }
  func.func @transform_2(%arg0: i32) -> (i32, i32) {
    %c0_i32 = arith.constant 0 : i32
    %c0_i32_0 = arith.constant 0 : i32
    %c0_i32_1 = arith.constant 0 : i32
    return %c0_i32, %c0_i32_0 : i32, i32
  }
  func.func @transform_3(%arg0: i32) -> (i32, i32, i32) {
    %c0_i32 = arith.constant 0 : i32
    %c0_i32_0 = arith.constant 0 : i32
    %c0_i32_1 = arith.constant 0 : i32
    return %arg0, %c0_i32, %c0_i32_0 : i32, i32, i32
  }
}

</mosaic_0001>

<llo_original>
// kernel: self_attention_conv_forward.1
$region0: #{self_attention_conv_forward.1}
  #allocation0 [shape = 'u32[]', space=smem, size = 0x4, offset = 0x4, fixed_abs, tag = 'smem constant byte address 0x4 - core index']
  #allocation1 [shape = 'u32[144,128]{1,0:T(1,128)}', space=vmem, size = 0x12000, scoped, tag = 'internal scratch']
  #allocation2 [shape = 'f32[1,1]{1,0:T(1,128)S(6)}', space=smem, size = 0x200, scoped, tag = 'scoped memory for self_attention_conv_forward.1']
  %s0 = inlined_call_operand.vmem [shape: f32[4,4,256], index: 0, kind: input, shape index: {}]
  %s1 = inlined_call_operand.vmem [shape: f32[4,4], index: 1, kind: input, shape index: {}]
  %s2 = inlined_call_operand.<no memory space> [shape: f32[1,1], index: 2, kind: input, shape index: {}]
  %s3 = inlined_call_operand.vmem [shape: f32[4,4,256], index: 3, kind: output, shape index: {}]
  %s4 = sld [smem:[#allocation0]]
  $region45: #{self_attention_conv_forward.1} parent=0
    _
  %s6 = ssub.s32 1, %s4
  %s7 = scalar_select 0, %s6, %s4
  %8 = sst [smem:[#allocation2]] %s2
  loop: start=0, step=1, limit=4
  $region2: #{self_attention_conv_forward.1} parent=0 // loop_pre_header
    _
  $region3: #{self_attention_conv_forward.1} parent=0 // loop_header
    %s10 = sphi 0, %s14
    %p11 = scmp.ge.s32.totalorder %s10, 4
    %s20 = sphi 0, %s22
    %s23 = sphi 0, %s20
    %s24 = sphi 0, %s23
    %s40 = sphi 0, %s24
    %s44 = sphi 0, %s44
    %s46 = sphi 0, %s44
    %s47 = sphi 0, %s46
    %s61 = sphi 0, %s47
    %s65 = sphi 0, %s65
    %s67 = sphi 0, %s65
    %s68 = sphi 0, %s67
    %s82 = sphi 0, %s68
    %s88 = sphi 0, %s90
    %s91 = sphi 0, %s88
    %s92 = sphi 0, %s91
    %s108 = sphi 0, %s92
  $region4: #{self_attention_conv_forward.1} parent=0 // loop_header_branch
    %13 = sbr.rel (%p11) target = $region8
  $region5: #{self_attention_conv_forward.1} parent=0 // loop_body
    %s15 = ssub.s32 %s10, 1
    %s16 = ssub.s32 %s10, 2
    %s17 = sadd.s32 %s10, 1
    %s18 = ssub.s32 %s10, %s17
    %p19 = scmp.eq.s32.totalorder %s18, 0
    %s21 = sadd.s32 %s20, 1
    %s22 = scalar_select %p19, %s20, %s21
    %p25 = pneg %p19
    %p26 = scmp.eq.s32.totalorder %s10, 1
    %p27 = por %p25, %p26
    %p28 = scmp.ne.s32.totalorder %s20, %s23
    %p29 = scmp.eq.s32.totalorder %s10, 0
    %p30 = por %p28, %p29
    %p31 = scmp.ne.s32.totalorder %s20, %s23
    %p32 = scmp.eq.s32.totalorder %s15, 1
    %p33 = por %p31, %p32
    %p34 = scmp.ne.s32.totalorder %s23, %s24
    %p35 = scmp.eq.s32.totalorder %s15, 0
    %p36 = por %p34, %p35
    %p37 = scmp.ne.s32.totalorder %s23, %s24
    %p38 = scmp.eq.s32.totalorder %s16, 1
    %p39 = por %p37, %p38
    %p41 = scmp.ne.s32.totalorder %s24, %s40
    %p42 = scmp.eq.s32.totalorder %s16, 0
    %p43 = por %p41, %p42
    %s45 = sadd.s32 %s44, 1
    %p48 = scmp.eq.s32.totalorder %s10, 1
    %p49 = scmp.ne.s32.totalorder %s44, %s46
    %p50 = scmp.eq.s32.totalorder %s10, 0
    %p51 = por %p49, %p50
    %p52 = scmp.ne.s32.totalorder %s44, %s46
    %p53 = scmp.eq.s32.totalorder %s15, 1
    %p54 = por %p52, %p53
    %p55 = scmp.ne.s32.totalorder %s46, %s47
    %p56 = scmp.eq.s32.totalorder %s15, 0
    %p57 = por %p55, %p56
    %p58 = scmp.ne.s32.totalorder %s46, %s47
    %p59 = scmp.eq.s32.totalorder %s16, 1
    %p60 = por %p58, %p59
    %p62 = scmp.ne.s32.totalorder %s47, %s61
    %p63 = scmp.eq.s32.totalorder %s16, 0
    %p64 = por %p62, %p63
    %s66 = sadd.s32 %s65, 1
    %p69 = scmp.eq.s32.totalorder %s10, 1
    %p70 = scmp.ne.s32.totalorder %s65, %s67
    %p71 = scmp.eq.s32.totalorder %s10, 0
    %p72 = por %p70, %p71
    %p73 = scmp.ne.s32.totalorder %s65, %s67
    %p74 = scmp.eq.s32.totalorder %s15, 1
    %p75 = por %p73, %p74
    %p76 = scmp.ne.s32.totalorder %s67, %s68
    %p77 = scmp.eq.s32.totalorder %s15, 0
    %p78 = por %p76, %p77
    %p79 = scmp.ne.s32.totalorder %s67, %s68
    %p80 = scmp.eq.s32.totalorder %s16, 1
    %p81 = por %p79, %p80
    %p83 = scmp.ne.s32.totalorder %s68, %s82
    %p84 = scmp.eq.s32.totalorder %s16, 0
    %p85 = por %p83, %p84
    %s86 = ssub.s32 %s10, %s17
    %p87 = scmp.eq.s32.totalorder %s86, 0
    %s89 = sadd.s32 %s88, 1
    %s90 = scalar_select %p87, %s88, %s89
    %p93 = pneg %p87
    %p94 = scmp.eq.s32.totalorder %s10, 1
    %p95 = por %p93, %p94
    %p96 = scmp.ne.s32.totalorder %s88, %s91
    %p97 = scmp.eq.s32.totalorder %s10, 0
    %p98 = por %p96, %p97
    %p99 = scmp.ne.s32.totalorder %s88, %s91
    %p100 = scmp.eq.s32.totalorder %s15, 1
    %p101 = por %p99, %p100
    %p102 = scmp.ne.s32.totalorder %s91, %s92
    %p103 = scmp.eq.s32.totalorder %s15, 0
    %p104 = por %p102, %p103
    %p105 = scmp.ne.s32.totalorder %s91, %s92
    %p106 = scmp.eq.s32.totalorder %s16, 1
    %p107 = por %p105, %p106
    %p109 = scmp.ne.s32.totalorder %s92, %s108
    %p110 = scmp.eq.s32.totalorder %s16, 0
    %p111 = por %p109, %p110
    %p112 = scmp.le.s32.totalorder 1, %s10
    %p113 = scmp.lt.s32.totalorder %s10, 3
    %p114 = pnand %p112, %p113
    %p115 = pneg %p114
    // Predicated region
    $region9: #{self_attention_conv_forward.1} parent=5 // pred_check
      _
    $region10: #{self_attention_conv_forward.1} parent=5 // pred_check_branch
      %117 = sbr.rel (%p114) target = $region12
    $region11: #{self_attention_conv_forward.1} parent=5 // pred_region
      %s118 = ssub.s32 %s10, 1
      // Predicated region
      $region13: #{self_attention_conv_forward.1} parent=11 // pred_check
        %p119 = pneg %p57
      $region14: #{self_attention_conv_forward.1} parent=11 // pred_check_branch
        %121 = sbr.rel (%p119) target = $region16
      $region15: #{self_attention_conv_forward.1} parent=11 // pred_region
        _
      $region16: #{self_attention_conv_forward.1} parent=11 // pred_fallthru
        _
      // Predicated region
      $region17: #{self_attention_conv_forward.1} parent=11 // pred_check
        %p122 = pneg %p78
      $region18: #{self_attention_conv_forward.1} parent=11 // pred_check_branch
        %124 = sbr.rel (%p122) target = $region20
      $region19: #{self_attention_conv_forward.1} parent=11 // pred_region
        _
      $region20: #{self_attention_conv_forward.1} parent=11 // pred_fallthru
        _
    $region12: #{self_attention_conv_forward.1} parent=5 // pred_fallthru
      _
    %p125 = scmp.lt.s32.totalorder %s10, 2
    // Predicated region
    $region21: #{self_attention_conv_forward.1} parent=5 // pred_check
      %p126 = pneg %p125
    $region22: #{self_attention_conv_forward.1} parent=5 // pred_check_branch
      %128 = sbr.rel (%p126) target = $region24
    $region23: #{self_attention_conv_forward.1} parent=5 // pred_region
      // Predicated region
      $region25: #{self_attention_conv_forward.1} parent=23 // pred_check
        %p129 = pneg %p30
      $region26: #{self_attention_conv_forward.1} parent=23 // pred_check_branch
        %131 = sbr.rel (%p129) target = $region28
      $region27: #{self_attention_conv_forward.1} parent=23 // pred_region
        %s132 = smul.u32 2, %s10
        %p133 = scmp.lt.s32.totalorder %s132, 3
        %s134 = scalar_select %p133, %s132, 3
        %s135 = smul.addr %s134, 2
        %s136 = smul.addr %s135, 4
        %s137 = scalar_lea.vmem %s0, %s136
        %s138 = smul.u32 2, %s10
      $region28: #{self_attention_conv_forward.1} parent=23 // pred_fallthru
        _
    $region24: #{self_attention_conv_forward.1} parent=5 // pred_fallthru
      _
    %p139 = scmp.le.s32.totalorder 1, %s10
    %p140 = scmp.lt.s32.totalorder %s10, 3
    %p141 = pnand %p139, %p140
    %p142 = pneg %p141
    // Predicated region
    $region29: #{self_attention_conv_forward.1} parent=5 // pred_check
      _
    $region30: #{self_attention_conv_forward.1} parent=5 // pred_check_branch
      %144 = sbr.rel (%p141) target = $region32
    $region31: #{self_attention_conv_forward.1} parent=5 // pred_region
      %s145 = ssub.s32 %s10, 1
      %s146 = smul.u32 2, %s15
      %p147 = scmp.lt.s32.totalorder %s146, 3
      %s148 = scalar_select %p147, %s146, 3
      %s149 = smul.addr %s148, 2
      %s150 = smul.addr %s149, 4
      %s151 = scalar_lea.vmem %s0, %s150
      %p152 = pneg %p36
      %p153 = pneg %p33
      %p154 = pneg %p57
      %p155 = pneg %p54
      %p156 = pneg %p78
      %p157 = pneg %p75
      %p158 = pneg %p104
      %p159 = pneg %p101
      %s160 = smul.u32 2, %s15
      %p161 = scmp.lt.s32.totalorder %s160, 3
      %s162 = scalar_select %p161, %s160, 3
      %s163 = smul.addr %s162, 2
      %s164 = smul.addr %s163, 4
      %s165 = scalar_lea.vmem %s3, %s164
      %s166 = smul.u32 2, %s15
      %p167 = scmp.lt.s32.totalorder %s166, 3
      %s168 = scalar_select %p167, %s166, 3
      %s169 = smul.addr %s168, 2
      %s170 = smul.addr %s169, 4
      %s171 = scalar_lea.vmem %s0, %s170
      %s172 = smul.u32 2, %s15
      %s173 = smul.u32 2, %s15
      %p174 = scmp.lt.s32.totalorder %s173, 3
      %s175 = scalar_select %p174, %s173, 3
      %s176 = smul.addr %s175, 2
      %s177 = smul.addr %s176, 4
      %s178 = scalar_lea.vmem %s3, %s177
      %s179 = smul.u32 2, %s15
      %v180 = vld [vmem:[%s171] sm:$0xff]
      %v181 = vld [vmem:[%s171 + $0x8] sm:$0xff]
      %s182 = sld [smem:[#allocation2]]
      %v184 = vcombine.high %v180, %v180
      %186 = vmatprep.subr.mxu0 %v184
      %187 = vmatpush1.xpose.msra.mxu0 %v180
      %188 = vmatprep.subr.mxu0 0.0
      %189 = vmatpush1.xpose.msra.mxu0 0.0
      %190 = vmatprep.subr.mxu0 0.0
      %191 = vmatpush1.xpose.msra.mxu0 0.0
      %192 = vmatprep.subr.mxu0 0.0
      %193 = vmatpush1.xpose.msra.mxu0 0.0
      %194 = vmatprep.subr.mxu0 0.0
      %195 = vmatpush1.xpose.msra.mxu0 0.0
      %196 = vmatprep.subr.mxu0 0.0
      %197 = vmatpush1.xpose.msra.mxu0 0.0
      %198 = vmatprep.subr.mxu0 0.0
      %199 = vmatpush1.xpose.msra.mxu0 0.0
      %200 = vmatprep.subr.mxu0 0.0
      %201 = vmatpush1.xpose.msra.mxu0 0.0
      %202 = vmatprep.subr.mxu0 0.0
      %203 = vmatpush1.xpose.msra.mxu0 0.0
      %204 = vmatprep.subr.mxu0 0.0
      %205 = vmatpush1.xpose.msra.mxu0 0.0
      %206 = vmatprep.subr.mxu0 0.0
      %207 = vmatpush1.xpose.msra.mxu0 0.0
      %208 = vmatprep.subr.mxu0 0.0
      %209 = vmatpush1.xpose.msra.mxu0 0.0
      %210 = vmatprep.subr.mxu0 0.0
      %211 = vmatpush1.xpose.msra.mxu0 0.0
      %212 = vmatprep.subr.mxu0 0.0
      %213 = vmatpush1.xpose.msra.mxu0 0.0
      %214 = vmatprep.subr.mxu0 0.0
      %215 = vmatpush1.xpose.msra.mxu0 0.0
      %216 = vmatprep.subr.mxu0 0.0
      %217 = vmatpush1.xpose.msra.mxu0 0.0
      %218 = vmatprep.subr.mxu0 0.0
      %219 = vmatpush1.xpose.msra.mxu0 0.0
      %220 = vmatprep.subr.mxu0 0.0
      %221 = vmatpush1.xpose.msra.mxu0 0.0
      %222 = vmatprep.subr.mxu0 0.0
      %223 = vmatpush1.xpose.msra.mxu0 0.0
      %224 = vmatprep.subr.mxu0 0.0
      %225 = vmatpush1.xpose.msra.mxu0 0.0
      %226 = vmatprep.subr.mxu0 0.0
      %227 = vmatpush1.xpose.msra.mxu0 0.0
      %228 = vmatprep.subr.mxu0 0.0
      %229 = vmatpush1.xpose.msra.mxu0 0.0
      %230 = vmatprep.subr.mxu0 0.0
      %231 = vmatpush1.xpose.msra.mxu0 0.0
      %232 = vmatprep.subr.mxu0 0.0
      %233 = vmatpush1.xpose.msra.mxu0 0.0
      %234 = vmatprep.subr.mxu0 0.0
      %235 = vmatpush1.xpose.msra.mxu0 0.0
      %236 = vmatprep.subr.mxu0 0.0
      %237 = vmatpush1.xpose.msra.mxu0 0.0
      %238 = vmatprep.subr.mxu0 0.0
      %239 = vmatpush1.xpose.msra.mxu0 0.0
      %240 = vmatprep.subr.mxu0 0.0
      %241 = vmatpush1.xpose.msra.mxu0 0.0
      %242 = vmatprep.subr.mxu0 0.0
      %243 = vmatpush1.xpose.msra.mxu0 0.0
      %244 = vmatprep.subr.mxu0 0.0
      %245 = vmatpush1.xpose.msra.mxu0 0.0
      %246 = vmatprep.subr.mxu0 0.0
      %247 = vmatpush1.xpose.msra.mxu0 0.0
      %248 = vmatprep.subr.mxu0 0.0
      %249 = vmatpush1.xpose.msra.mxu0 0.0
      %250 = vmatprep.mubr.f32.mxu0 %v184
      %251 = vmatmul.mubr.f32.gmra.mrb[0].mxu0 %v180
      %v252 = vpop.f32.mrb[0].mxu0
      %v253 = vadd.f32 0.0, %v252
      %v254 = vpop.f32.mrb[0].mxu0
      %255 = vdwg.mxu0
      %v257 = vcombine.high %v181, %v181
      %259 = vmatprep.subr.mxu0 %v257
      %260 = vmatpush1.xpose.msra.mxu0 %v181
      %261 = vmatprep.subr.mxu0 0.0
      %262 = vmatpush1.xpose.msra.mxu0 0.0
      %263 = vmatprep.subr.mxu0 0.0
      %264 = vmatpush1.xpose.msra.mxu0 0.0
      %265 = vmatprep.subr.mxu0 0.0
      %266 = vmatpush1.xpose.msra.mxu0 0.0
      %267 = vmatprep.subr.mxu0 0.0
      %268 = vmatpush1.xpose.msra.mxu0 0.0
      %269 = vmatprep.subr.mxu0 0.0
      %270 = vmatpush1.xpose.msra.mxu0 0.0
      %271 = vmatprep.subr.mxu0 0.0
      %272 = vmatpush1.xpose.msra.mxu0 0.0
      %273 = vmatprep.subr.mxu0 0.0
      %274 = vmatpush1.xpose.msra.mxu0 0.0
      %275 = vmatprep.subr.mxu0 0.0
      %276 = vmatpush1.xpose.msra.mxu0 0.0
      %277 = vmatprep.subr.mxu0 0.0
      %278 = vmatpush1.xpose.msra.mxu0 0.0
      %279 = vmatprep.subr.mxu0 0.0
      %280 = vmatpush1.xpose.msra.mxu0 0.0
      %281 = vmatprep.subr.mxu0 0.0
      %282 = vmatpush1.xpose.msra.mxu0 0.0
      %283 = vmatprep.subr.mxu0 0.0
      %284 = vmatpush1.xpose.msra.mxu0 0.0
      %285 = vmatprep.subr.mxu0 0.0
      %286 = vmatpush1.xpose.msra.mxu0 0.0
      %287 = vmatprep.subr.mxu0 0.0
      %288 = vmatpush1.xpose.msra.mxu0 0.0
      %289 = vmatprep.subr.mxu0 0.0
      %290 = vmatpush1.xpose.msra.mxu0 0.0
      %291 = vmatprep.subr.mxu0 0.0
      %292 = vmatpush1.xpose.msra.mxu0 0.0
      %293 = vmatprep.subr.mxu0 0.0
      %294 = vmatpush1.xpose.msra.mxu0 0.0
      %295 = vmatprep.subr.mxu0 0.0
      %296 = vmatpush1.xpose.msra.mxu0 0.0
      %297 = vmatprep.subr.mxu0 0.0
      %298 = vmatpush1.xpose.msra.mxu0 0.0
      %299 = vmatprep.subr.mxu0 0.0
      %300 = vmatpush1.xpose.msra.mxu0 0.0
      %301 = vmatprep.subr.mxu0 0.0
      %302 = vmatpush1.xpose.msra.mxu0 0.0
      %303 = vmatprep.subr.mxu0 0.0
      %304 = vmatpush1.xpose.msra.mxu0 0.0
      %305 = vmatprep.subr.mxu0 0.0
      %306 = vmatpush1.xpose.msra.mxu0 0.0
      %307 = vmatprep.subr.mxu0 0.0
      %308 = vmatpush1.xpose.msra.mxu0 0.0
      %309 = vmatprep.subr.mxu0 0.0
      %310 = vmatpush1.xpose.msra.mxu0 0.0
      %311 = vmatprep.subr.mxu0 0.0
      %312 = vmatpush1.xpose.msra.mxu0 0.0
      %313 = vmatprep.subr.mxu0 0.0
      %314 = vmatpush1.xpose.msra.mxu0 0.0
      %315 = vmatprep.subr.mxu0 0.0
      %316 = vmatpush1.xpose.msra.mxu0 0.0
      %317 = vmatprep.subr.mxu0 0.0
      %318 = vmatpush1.xpose.msra.mxu0 0.0
      %319 = vmatprep.subr.mxu0 0.0
      %320 = vmatpush1.xpose.msra.mxu0 0.0
      %321 = vmatprep.subr.mxu0 0.0
      %322 = vmatpush1.xpose.msra.mxu0 0.0
      %323 = vmatprep.mubr.f32.mxu0 %v257
      %324 = vmatmul.mubr.f32.gmra.mrb[0].mxu0 %v181
      %v325 = vpop.f32.mrb[0].mxu0
      %v326 = vadd.f32 0.0, %v325
      %v327 = vpop.f32.mrb[0].mxu0
      %328 = vdwg.mxu0
      %v329 = vld [vmem:[%s1] sm:$0xf]
      %vm330 = vcmask 31744
      %v332 = vsel %vm330, %v253, 0
      %vm334 = vcmask 1043456
      %v336 = vsel %vm334, %v329, 0
      %338 = vmatprep.subr.mxu0 0.0
      %339 = vmatpush1.msra.mxu0 %v336
      %340 = vmatprep.subr.mxu0 0.0
      %341 = vmatpush1.msra.mxu0 0.0
      %342 = vmatprep.subr.mxu0 0.0
      %343 = vmatpush1.msra.mxu0 0.0
      %344 = vmatprep.subr.mxu0 0.0
      %345 = vmatpush1.msra.mxu0 0.0
      %346 = vmatprep.subr.mxu0 0.0
      %347 = vmatpush1.msra.mxu0 0.0
      %348 = vmatprep.subr.mxu0 0.0
      %349 = vmatpush1.msra.mxu0 0.0
      %350 = vmatprep.subr.mxu0 0.0
      %351 = vmatpush1.msra.mxu0 0.0
      %352 = vmatprep.subr.mxu0 0.0
      %353 = vmatpush1.msra.mxu0 0.0
      %354 = vmatprep.subr.mxu0 0.0
      %355 = vmatpush1.msra.mxu0 0.0
      %356 = vmatprep.subr.mxu0 0.0
      %357 = vmatpush1.msra.mxu0 0.0
      %358 = vmatprep.subr.mxu0 0.0
      %359 = vmatpush1.msra.mxu0 0.0
      %360 = vmatprep.subr.mxu0 0.0
      %361 = vmatpush1.msra.mxu0 0.0
      %362 = vmatprep.subr.mxu0 0.0
      %363 = vmatpush1.msra.mxu0 0.0
      %364 = vmatprep.subr.mxu0 0.0
      %365 = vmatpush1.msra.mxu0 0.0
      %366 = vmatprep.subr.mxu0 0.0
      %367 = vmatpush1.msra.mxu0 0.0
      %368 = vmatprep.subr.mxu0 0.0
      %369 = vmatpush1.msra.mxu0 0.0
      %370 = vmatprep.subr.mxu0 0.0
      %371 = vmatpush1.msra.mxu0 0.0
      %372 = vmatprep.subr.mxu0 0.0
      %373 = vmatpush1.msra.mxu0 0.0
      %374 = vmatprep.subr.mxu0 0.0
      %375 = vmatpush1.msra.mxu0 0.0
      %376 = vmatprep.subr.mxu0 0.0
      %377 = vmatpush1.msra.mxu0 0.0
      %378 = vmatprep.subr.mxu0 0.0
      %379 = vmatpush1.msra.mxu0 0.0
      %380 = vmatprep.subr.mxu0 0.0
      %381 = vmatpush1.msra.mxu0 0.0
      %382 = vmatprep.subr.mxu0 0.0
      %383 = vmatpush1.msra.mxu0 0.0
      %384 = vmatprep.subr.mxu0 0.0
      %385 = vmatpush1.msra.mxu0 0.0
      %386 = vmatprep.subr.mxu0 0.0
      %387 = vmatpush1.msra.mxu0 0.0
      %388 = vmatprep.subr.mxu0 0.0
      %389 = vmatpush1.msra.mxu0 0.0
      %390 = vmatprep.subr.mxu0 0.0
      %391 = vmatpush1.msra.mxu0 0.0
      %392 = vmatprep.subr.mxu0 0.0
      %393 = vmatpush1.msra.mxu0 0.0
      %394 = vmatprep.subr.mxu0 0.0
      %395 = vmatpush1.msra.mxu0 0.0
      %396 = vmatprep.subr.mxu0 0.0
      %397 = vmatpush1.msra.mxu0 0.0
      %398 = vmatprep.subr.mxu0 0.0
      %399 = vmatpush1.msra.mxu0 0.0
      %400 = vmatprep.subr.mxu0 0.0
      %401 = vmatpush1.msra.mxu0 0.0
      %402 = vmatprep.mubr.f32.mxu0 0.0
      %403 = vmatmul.mubr.f32.gmra.mrb[0].mxu0 %v332
      %v404 = vpop.f32.mrb[0].mxu0
      %v405 = vadd.f32 0.0, %v404
      %v406 = vpop.f32.mrb[0].mxu0
      %407 = vdwg.mxu0
      %v409 = vsel %vm330, %v326, 0
      %411 = vmatprep.subr.mxu0 0.0
      %412 = vmatpush1.msra.mxu0 %v336
      %413 = vmatprep.subr.mxu0 0.0
      %414 = vmatpush1.msra.mxu0 0.0
      %415 = vmatprep.subr.mxu0 0.0
      %416 = vmatpush1.msra.mxu0 0.0
      %417 = vmatprep.subr.mxu0 0.0
      %418 = vmatpush1.msra.mxu0 0.0
      %419 = vmatprep.subr.mxu0 0.0
      %420 = vmatpush1.msra.mxu0 0.0
      %421 = vmatprep.subr.mxu0 0.0
      %422 = vmatpush1.msra.mxu0 0.0
      %423 = vmatprep.subr.mxu0 0.0
      %424 = vmatpush1.msra.mxu0 0.0
      %425 = vmatprep.subr.mxu0 0.0
      %426 = vmatpush1.msra.mxu0 0.0
      %427 = vmatprep.subr.mxu0 0.0
      %428 = vmatpush1.msra.mxu0 0.0
      %429 = vmatprep.subr.mxu0 0.0
      %430 = vmatpush1.msra.mxu0 0.0
      %431 = vmatprep.subr.mxu0 0.0
      %432 = vmatpush1.msra.mxu0 0.0
      %433 = vmatprep.subr.mxu0 0.0
      %434 = vmatpush1.msra.mxu0 0.0
      %435 = vmatprep.subr.mxu0 0.0
      %436 = vmatpush1.msra.mxu0 0.0
      %437 = vmatprep.subr.mxu0 0.0
      %438 = vmatpush1.msra.mxu0 0.0
      %439 = vmatprep.subr.mxu0 0.0
      %440 = vmatpush1.msra.mxu0 0.0
      %441 = vmatprep.subr.mxu0 0.0
      %442 = vmatpush1.msra.mxu0 0.0
      %443 = vmatprep.subr.mxu0 0.0
      %444 = vmatpush1.msra.mxu0 0.0
      %445 = vmatprep.subr.mxu0 0.0
      %446 = vmatpush1.msra.mxu0 0.0
      %447 = vmatprep.subr.mxu0 0.0
      %448 = vmatpush1.msra.mxu0 0.0
      %449 = vmatprep.subr.mxu0 0.0
      %450 = vmatpush1.msra.mxu0 0.0
      %451 = vmatprep.subr.mxu0 0.0
      %452 = vmatpush1.msra.mxu0 0.0
      %453 = vmatprep.subr.mxu0 0.0
      %454 = vmatpush1.msra.mxu0 0.0
      %455 = vmatprep.subr.mxu0 0.0
      %456 = vmatpush1.msra.mxu0 0.0
      %457 = vmatprep.subr.mxu0 0.0
      %458 = vmatpush1.msra.mxu0 0.0
      %459 = vmatprep.subr.mxu0 0.0
      %460 = vmatpush1.msra.mxu0 0.0
      %461 = vmatprep.subr.mxu0 0.0
      %462 = vmatpush1.msra.mxu0 0.0
      %463 = vmatprep.subr.mxu0 0.0
      %464 = vmatpush1.msra.mxu0 0.0
      %465 = vmatprep.subr.mxu0 0.0
      %466 = vmatpush1.msra.mxu0 0.0
      %467 = vmatprep.subr.mxu0 0.0
      %468 = vmatpush1.msra.mxu0 0.0
      %469 = vmatprep.subr.mxu0 0.0
      %470 = vmatpush1.msra.mxu0 0.0
      %471 = vmatprep.subr.mxu0 0.0
      %472 = vmatpush1.msra.mxu0 0.0
      %473 = vmatprep.subr.mxu0 0.0
      %474 = vmatpush1.msra.mxu0 0.0
      %475 = vmatprep.mubr.f32.mxu0 0.0
      %476 = vmatmul.mubr.f32.gmra.mrb[0].mxu0 %v409
      %v477 = vpop.f32.mrb[0].mxu0
      %v478 = vadd.f32 0.0, %v477
      %v479 = vpop.f32.mrb[0].mxu0
      %480 = vdwg.mxu0
      %v482 = vsel %vm330, %v405, 0
      %v484 = vsel %vm334, %v180, 0
      %v486 = vsel %vm334, %v184, 0
      %488 = vmatprep.subr.mxu0 %v486
      %489 = vmatpush1.msra.mxu0 %v484
      %490 = vmatprep.subr.mxu0 0.0
      %491 = vmatpush1.msra.mxu0 0.0
      %492 = vmatprep.subr.mxu0 0.0
      %493 = vmatpush1.msra.mxu0 0.0
      %494 = vmatprep.subr.mxu0 0.0
      %495 = vmatpush1.msra.mxu0 0.0
      %496 = vmatprep.subr.mxu0 0.0
      %497 = vmatpush1.msra.mxu0 0.0
      %498 = vmatprep.subr.mxu0 0.0
      %499 = vmatpush1.msra.mxu0 0.0
      %500 = vmatprep.subr.mxu0 0.0
      %501 = vmatpush1.msra.mxu0 0.0
      %502 = vmatprep.subr.mxu0 0.0
      %503 = vmatpush1.msra.mxu0 0.0
      %504 = vmatprep.subr.mxu0 0.0
      %505 = vmatpush1.msra.mxu0 0.0
      %506 = vmatprep.subr.mxu0 0.0
      %507 = vmatpush1.msra.mxu0 0.0
      %508 = vmatprep.subr.mxu0 0.0
      %509 = vmatpush1.msra.mxu0 0.0
      %510 = vmatprep.subr.mxu0 0.0
      %511 = vmatpush1.msra.mxu0 0.0
      %512 = vmatprep.subr.mxu0 0.0
      %513 = vmatpush1.msra.mxu0 0.0
      %514 = vmatprep.subr.mxu0 0.0
      %515 = vmatpush1.msra.mxu0 0.0
      %516 = vmatprep.subr.mxu0 0.0
      %517 = vmatpush1.msra.mxu0 0.0
      %518 = vmatprep.subr.mxu0 0.0
      %519 = vmatpush1.msra.mxu0 0.0
      %520 = vmatprep.subr.mxu0 0.0
      %521 = vmatpush1.msra.mxu0 0.0
      %522 = vmatprep.subr.mxu0 0.0
      %523 = vmatpush1.msra.mxu0 0.0
      %524 = vmatprep.subr.mxu0 0.0
      %525 = vmatpush1.msra.mxu0 0.0
      %526 = vmatprep.subr.mxu0 0.0
      %527 = vmatpush1.msra.mxu0 0.0
      %528 = vmatprep.subr.mxu0 0.0
      %529 = vmatpush1.msra.mxu0 0.0
      %530 = vmatprep.subr.mxu0 0.0
      %531 = vmatpush1.msra.mxu0 0.0
      %532 = vmatprep.subr.mxu0 0.0
      %533 = vmatpush1.msra.mxu0 0.0
      %534 = vmatprep.subr.mxu0 0.0
      %535 = vmatpush1.msra.mxu0 0.0
      %536 = vmatprep.subr.mxu0 0.0
      %537 = vmatpush1.msra.mxu0 0.0
      %538 = vmatprep.subr.mxu0 0.0
      %539 = vmatpush1.msra.mxu0 0.0
      %540 = vmatprep.subr.mxu0 0.0
      %541 = vmatpush1.msra.mxu0 0.0
      %542 = vmatprep.subr.mxu0 0.0
      %543 = vmatpush1.msra.mxu0 0.0
      %544 = vmatprep.subr.mxu0 0.0
      %545 = vmatpush1.msra.mxu0 0.0
      %546 = vmatprep.subr.mxu0 0.0
      %547 = vmatpush1.msra.mxu0 0.0
      %548 = vmatprep.subr.mxu0 0.0
      %549 = vmatpush1.msra.mxu0 0.0
      %550 = vmatprep.subr.mxu0 0.0
      %551 = vmatpush1.msra.mxu0 0.0
      %552 = vmatprep.mubr.f32.mxu0 0.0
      %553 = vmatmul.mubr.f32.gmra.mrb[0].mxu0 %v482
      %v554 = vpop.f32.mrb[0].mxu0
      %v555 = vadd.f32 0.0, %v554
      %v556 = vpop.f32.mrb[0].mxu0
      %v557 = vadd.f32 0.0, %v556
      %558 = vdwg.mxu0
      %v560 = vsel %vm330, %v478, 0
      %v562 = vsel %vm334, %v181, 0
      %v564 = vsel %vm334, %v257, 0
      %566 = vmatprep.subr.mxu0 %v564
      %567 = vmatpush1.msra.mxu0 %v562
      %568 = vmatprep.subr.mxu0 0.0
      %569 = vmatpush1.msra.mxu0 0.0
      %570 = vmatprep.subr.mxu0 0.0
      %571 = vmatpush1.msra.mxu0 0.0
      %572 = vmatprep.subr.mxu0 0.0
      %573 = vmatpush1.msra.mxu0 0.0
      %574 = vmatprep.subr.mxu0 0.0
      %575 = vmatpush1.msra.mxu0 0.0
      %576 = vmatprep.subr.mxu0 0.0
      %577 = vmatpush1.msra.mxu0 0.0
      %578 = vmatprep.subr.mxu0 0.0
      %579 = vmatpush1.msra.mxu0 0.0
      %580 = vmatprep.subr.mxu0 0.0
      %581 = vmatpush1.msra.mxu0 0.0
      %582 = vmatprep.subr.mxu0 0.0
      %583 = vmatpush1.msra.mxu0 0.0
      %584 = vmatprep.subr.mxu0 0.0
      %585 = vmatpush1.msra.mxu0 0.0
      %586 = vmatprep.subr.mxu0 0.0
      %587 = vmatpush1.msra.mxu0 0.0
      %588 = vmatprep.subr.mxu0 0.0
      %589 = vmatpush1.msra.mxu0 0.0
      %590 = vmatprep.subr.mxu0 0.0
      %591 = vmatpush1.msra.mxu0 0.0
      %592 = vmatprep.subr.mxu0 0.0
      %593 = vmatpush1.msra.mxu0 0.0
      %594 = vmatprep.subr.mxu0 0.0
      %595 = vmatpush1.msra.mxu0 0.0
      %596 = vmatprep.subr.mxu0 0.0
      %597 = vmatpush1.msra.mxu0 0.0
      %598 = vmatprep.subr.mxu0 0.0
      %599 = vmatpush1.msra.mxu0 0.0
      %600 = vmatprep.subr.mxu0 0.0
      %601 = vmatpush1.msra.mxu0 0.0
      %602 = vmatprep.subr.mxu0 0.0
      %603 = vmatpush1.msra.mxu0 0.0
      %604 = vmatprep.subr.mxu0 0.0
      %605 = vmatpush1.msra.mxu0 0.0
      %606 = vmatprep.subr.mxu0 0.0
      %607 = vmatpush1.msra.mxu0 0.0
      %608 = vmatprep.subr.mxu0 0.0
      %609 = vmatpush1.msra.mxu0 0.0
      %610 = vmatprep.subr.mxu0 0.0
      %611 = vmatpush1.msra.mxu0 0.0
      %612 = vmatprep.subr.mxu0 0.0
      %613 = vmatpush1.msra.mxu0 0.0
      %614 = vmatprep.subr.mxu0 0.0
      %615 = vmatpush1.msra.mxu0 0.0
      %616 = vmatprep.subr.mxu0 0.0
      %617 = vmatpush1.msra.mxu0 0.0
      %618 = vmatprep.subr.mxu0 0.0
      %619 = vmatpush1.msra.mxu0 0.0
      %620 = vmatprep.subr.mxu0 0.0
      %621 = vmatpush1.msra.mxu0 0.0
      %622 = vmatprep.subr.mxu0 0.0
      %623 = vmatpush1.msra.mxu0 0.0
      %624 = vmatprep.subr.mxu0 0.0
      %625 = vmatpush1.msra.mxu0 0.0
      %626 = vmatprep.subr.mxu0 0.0
      %627 = vmatpush1.msra.mxu0 0.0
      %628 = vmatprep.subr.mxu0 0.0
      %629 = vmatpush1.msra.mxu0 0.0
      %630 = vmatprep.mubr.f32.mxu0 0.0
      %631 = vmatmul.mubr.f32.gmra.mrb[0].mxu0 %v560
      %v632 = vpop.f32.mrb[0].mxu0
      %v633 = vadd.f32 0.0, %v632
      %v634 = vpop.f32.mrb[0].mxu0
      %v635 = vadd.f32 0.0, %v634
      %636 = vdwg.mxu0
      %v637 = vstv %s182
      %v638 = vmul.f32 %v637, %v555
      %v639 = vmul.f32 %v637, %v557
      %v640 = vmul.f32 %v637, %v633
      %v641 = vmul.f32 %v637, %v635
      %v642 = vadd.f32 %v638, %v180
      %v643 = vadd.f32 %v639, %v184
      %v644 = vadd.f32 %v640, %v181
      %v645 = vadd.f32 %v641, %v257
      %v650 = vcombine.low %v642, %v643
      %v651 = vcombine.low %v644, %v645
      %654 = vst [vmem:[%s178] sm:$0xff] %v650
      %655 = vst [vmem:[%s178 + $0x8] sm:$0xff] %v651
      %s656 = smul.u32 2, %s15
      %p657 = scmp.lt.s32.totalorder %s656, 3
      %s658 = scalar_select %p657, %s656, 3
      %s659 = smul.addr %s658, 2
      %s660 = smul.addr %s659, 4
      %s661 = scalar_lea.vmem %s3, %s660
      // Predicated region
      $region33: #{self_attention_conv_forward.1} parent=31 // pred_check
        %p662 = pneg %p101
      $region34: #{self_attention_conv_forward.1} parent=31 // pred_check_branch
        %664 = sbr.rel (%p662) target = $region36
      $region35: #{self_attention_conv_forward.1} parent=31 // pred_region
        %s665 = smul.u32 2, %s15
      $region36: #{self_attention_conv_forward.1} parent=31 // pred_fallthru
        _
    $region32: #{self_attention_conv_forward.1} parent=5 // pred_fallthru
      _
    %p666 = scmp.le.s32.totalorder 2, %s10
    // Predicated region
    $region37: #{self_attention_conv_forward.1} parent=5 // pred_check
      %p667 = pneg %p666
    $region38: #{self_attention_conv_forward.1} parent=5 // pred_check_branch
      %669 = sbr.rel (%p667) target = $region40
    $region39: #{self_attention_conv_forward.1} parent=5 // pred_region
      %s670 = ssub.s32 %s10, 2
      // Predicated region
      $region41: #{self_attention_conv_forward.1} parent=39 // pred_check
        %p671 = pneg %p107
      $region42: #{self_attention_conv_forward.1} parent=39 // pred_check_branch
        %673 = sbr.rel (%p671) target = $region44
      $region43: #{self_attention_conv_forward.1} parent=39 // pred_region
        %s674 = smul.u32 2, %s16
        %p675 = scmp.lt.s32.totalorder %s674, 3
        %s676 = scalar_select %p675, %s674, 3
        %s677 = smul.addr %s676, 2
        %s678 = smul.addr %s677, 4
        %s679 = scalar_lea.vmem %s3, %s678
      $region44: #{self_attention_conv_forward.1} parent=39 // pred_fallthru
        _
    $region40: #{self_attention_conv_forward.1} parent=5 // pred_fallthru
      _
  $region6: #{self_attention_conv_forward.1} parent=0 // loop_footer
    %s14 = sadd.s32 1, %s10
  $region7: #{self_attention_conv_forward.1} parent=0 // loop_footer_branch
    %9 = sbr.rel target = $region3
  $region8: #{self_attention_conv_forward.1} parent=0 // loop_exit
    _

</llo_original>
